<compile_context>
chip_gen: v5e
topology: v5e:2x2
jax: 0.10.0
libtpu: 0.0.40
codegen_flags: <defaults>
</compile_context>

<pallas_src>
import functools
import math

import jax
import jax.numpy as jnp
from jax.experimental import pallas as pl
from jax.experimental.pallas import tpu as pltpu


_LANE = 128
_VMEM_LIMIT_BYTES = 48 * 1024 * 1024      # headroom under v7x's 64 MiB physical VMEM
_BLOCK_BYTES_PER_ARRAY = 4 * 1024 * 1024  # per-array, per-buffer tile budget


def _plan_2d(total_elems):
    """Pick a lane-dense (rows, cols) view of a flat buffer of `total_elems`."""
    for cols in (8192, 4096, 2048, 1024, 512, 256, _LANE):
        if total_elems % cols == 0:
            return total_elems // cols, cols
    # Fallback: single row (still correct, just not lane-tiled).
    return 1, total_elems


def _plan_block_rows(rows, cols, itemsize):
    """Largest sublane-aligned row-block that stays within the VMEM budget."""
    br = max(1, _BLOCK_BYTES_PER_ARRAY // max(1, cols * itemsize))
    br = min(rows, br)
    if br >= 8:
        br = (br // 8) * 8   # keep second-to-last block dim a multiple of 8
    else:
        br = rows            # tiny extent: block equals the full dim
    return br


# ---------------------------------------------------------------------------
# Kernels
# ---------------------------------------------------------------------------

def _residual_add_kernel(fx_ref, x_ref, o_ref):
    # out = fn(x) + x, with fn(x) precomputed outside (general fn).
    o_ref[...] = fx_ref[...] + x_ref[...]


def _residual_fused_kernel(x_ref, o_ref, *, fn):
    # out = fn(x) + x with an elementwise fn fused into the kernel.
    x = x_ref[...]
    o_ref[...] = (fn(x) + x).astype(o_ref.dtype)


# ---------------------------------------------------------------------------
# Wrapper
# ---------------------------------------------------------------------------

def _call_elementwise(kernel, inputs, out_dtype):
    """Run an elementwise Pallas kernel over same-shaped inputs, lane-dense."""
    shape = inputs[0].shape
    total = math.prod(shape) if shape else 1
    rows, cols = _plan_2d(total)
    flat = [a.reshape(rows, cols) for a in inputs]   # metadata-only reshape

    br = _plan_block_rows(rows, cols, jnp.dtype(out_dtype).itemsize)
    grid = (pl.cdiv(rows, br),)
    spec = pl.BlockSpec((br, cols), lambda i: (i, 0))

    out2d = pl.pallas_call(
        kernel,
        out_shape=jax.ShapeDtypeStruct((rows, cols), out_dtype),
        grid=grid,
        in_specs=[spec] * len(flat),
        out_specs=spec,
        compiler_params=pltpu.CompilerParams(
            dimension_semantics=("parallel",),
            vmem_limit_bytes=_VMEM_LIMIT_BYTES,
        ),
    )(*flat)
    return out2d.reshape(shape)


def residual_add(fx, x):
    """Pallas residual add: fn(x) + x, with fx = fn(x) already computed."""
    assert fx.shape == x.shape, "Residual: fn(x) must have the same shape as x"
    out_dtype = jnp.result_type(fx.dtype, x.dtype)
    fx = fx.astype(out_dtype)
    x = x.astype(out_dtype)
    return _call_elementwise(_residual_add_kernel, [fx, x], out_dtype)


def residual_fused(x, fn):
    """Residual with an elementwise `fn` fused into the Pallas kernel."""
    kernel = functools.partial(_residual_fused_kernel, fn=fn)
    return _call_elementwise(kernel, [x], x.dtype)


class Residual:
    """JAX/Pallas port of the PyTorch `Residual` module: forward(x) = fn(x) + x."""

    def __init__(self, fn, fuse_elementwise=False):
        self.fn = fn
        self.fuse_elementwise = fuse_elementwise

    def __call__(self, x):
        if self.fuse_elementwise:
            # Elementwise fn: fuse it into the kernel so fn(x) never
            # round-trips through HBM (saves a full extra HBM pass).
            return residual_fused(x, self.fn)
        # TODO(synk): an arbitrary sub-module `fn` (attention, MLP, ...) has no
        # clean single-Pallas-kernel equivalent; it runs as regular JAX and
        # only the residual add is the Pallas kernel.
        return residual_add(self.fn(x), x)


if __name__ == "__main__":
    key = jax.random.PRNGKey(0)
    x = jax.random.normal(key, (2, 4, 16, 16), dtype=jnp.float32)

    fn = lambda t: 0.5 * jnp.tanh(t)   # deterministic stand-in sub-module

    y_ref = fn(x) + x

    # Fused path (elementwise fn lowered inside the kernel).
    y_fused = jax.block_until_ready(Residual(fn, fuse_elementwise=True)(x))
    assert y_fused.shape == x.shape and y_fused.dtype == x.dtype
    assert jnp.allclose(y_fused, y_ref, atol=1e-5, rtol=1e-5)

    # General path (fn runs as plain JAX, Pallas does the residual add).
    y_gen = jax.block_until_ready(Residual(fn)(x))
    assert y_gen.shape == x.shape and y_gen.dtype == x.dtype
    assert jnp.allclose(y_gen, y_ref, atol=1e-5, rtol=1e-5)

    print("KERNEL_OK")
</pallas_src>

<mosaic_0001>
module attributes {stable_mosaic.version = 11 : i64} {
  func.func @_residual_fused_kernel(%arg0: i32, %arg1: memref<1x2048xf32, #tpu.memory_space<vmem>>, %arg2: memref<1x2048xf32, #tpu.memory_space<vmem>>) attributes {dimension_semantics = [#tpu.dimension_semantics<parallel>], iteration_bounds = array<i64: 1>, scalar_prefetch = 0 : i64, scratch_operands = 0 : i64, tpu.core_type = #tpu.core_type<tc>, window_params = [{transform_indices = @transform_0, window_bounds = array<i64: 1, 2048>}, {transform_indices = @transform_1, window_bounds = array<i64: 1, 2048>}]} {
    %c0 = arith.constant 0 : index
    %c0_0 = arith.constant 0 : index
    %0 = vector.load %arg1[%c0, %c0_0] : memref<1x2048xf32, #tpu.memory_space<vmem>>, vector<1x2048xf32>
    %1 = math.tanh %0 : vector<1x2048xf32>
    %cst = arith.constant 5.000000e-01 : f32
    %2 = vector.broadcast %cst : f32 to vector<1x2048xf32>
    %3 = arith.mulf %2, %1 : vector<1x2048xf32>
    %4 = arith.addf %3, %0 : vector<1x2048xf32>
    %c0_1 = arith.constant 0 : index
    %c0_2 = arith.constant 0 : index
    %5 = vector.load %arg2[%c0_1, %c0_2] : memref<1x2048xf32, #tpu.memory_space<vmem>>, vector<1x2048xf32>
    tpu.vector_store %arg2[%c0_1, %c0_2], %4 {strides = array<i32>} : memref<1x2048xf32, #tpu.memory_space<vmem>>, vector<1x2048xf32>,
    return
  }
  func.func @transform_0(%arg0: i32) -> (i32, i32) {
    %c0_i32 = arith.constant 0 : i32
    %c0_i32_0 = arith.constant 0 : i32
    return %arg0, %c0_i32 : i32, i32
  }
  func.func @transform_1(%arg0: i32) -> (i32, i32) {
    %c0_i32 = arith.constant 0 : i32
    %c0_i32_0 = arith.constant 0 : i32
    return %arg0, %c0_i32 : i32, i32
  }
}

</mosaic_0001>

<llo_original>
// kernel: tpu_custom_call.1
$region0: #{tpu_custom_call.1}
  #allocation0 [shape = 'u32[]', space=smem, size = 0x4, offset = 0x4, fixed_abs, tag = 'smem constant byte address 0x4 - core index']
  #allocation1 [shape = 'u32[72,128]{1,0:T(1,128)}', space=vmem, size = 0x9000, scoped, tag = 'internal scratch']
  %s0 = inlined_call_operand.hbm [shape: f32[1,2048], index: 0, kind: input, shape index: {}]
  %s1 = inlined_call_operand.hbm [shape: f32[1,2048], index: 1, kind: output, shape index: {}]
  %s2 = sld [smem:[#allocation0]]
  $region18: #{tpu_custom_call.1} parent=0
    _
  %s4 = ssub.s32 1, %s2
  %s5 = scalar_select 0, %s4, %s2
  $region1: #{tpu_custom_call.1} parent=0
    #allocation2 [shape = 'u8[8192]{0}', space=vmem, size = 0x2000, scoped, tag = 'input window, operand 0, single buffered']
    #allocation3 [shape = 's32[1]{0}', space=sflag, size = 0x4, scoped, tag = 'scoped memory for tpu_custom_call.1']
    #allocation4 [shape = 's32[1]{0}', space=sflag, size = 0x4, scoped, tag = 'scoped memory for tpu_custom_call.1']
    #allocation5 [shape = 'u8[8192]{0}', space=vmem, size = 0x2000, scoped, tag = 'output window, operand 0, single buffered']
    %6 = vsyncpa [#allocation3], 0
    %7 = vsyncpa [#allocation4], 0
    // Predicated region
    $region2: #{tpu_custom_call.1} parent=1 // pred_check
      _
    $region3: #{tpu_custom_call.1} parent=1 // pred_check_branch
      %9 = sbr.rel (0) target = $region5
    $region4: #{tpu_custom_call.1} parent=1 // pred_region
      %11 = vsyncadd [#allocation3], 0
      %s13 = sshll.u32 %s0, 4
      %s14 = int_to_ptr.hbm [resolvable:$true] %s13
      %s15 = sshll.u32 [#allocation2], 4
      %s16 = int_to_ptr.vmem [resolvable:$true] %s15
      %18 = dma.hbm_to_vmem [thread:$0]  %s14, 256, %s16, [#allocation3]
    $region5: #{tpu_custom_call.1} parent=1 // pred_fallthru
      _
    // Predicated region
    $region6: #{tpu_custom_call.1} parent=1 // pred_check
      _
    $region7: #{tpu_custom_call.1} parent=1 // pred_check_branch
      %20 = sbr.rel (0) target = $region9
    $region8: #{tpu_custom_call.1} parent=1 // pred_region
      %22 = dma.done [#allocation3], 256
    $region9: #{tpu_custom_call.1} parent=1 // pred_fallthru
      _
    %v23 = vld [vmem:[#allocation2] sm:$0xff]
    %v24 = vld [vmem:[#allocation2 + $0x8] sm:$0xff]
    %v25 = vtanh.pop %v23
    %v26 = vtanh.pop %v24
    %v27 = vmul.f32 %v25, 0.5
    %v28 = vmul.f32 %v26, 0.5
    %v29 = vadd.f32 %v27, %v23
    %v30 = vadd.f32 %v28, %v24
    %31 = vst [vmem:[#allocation5] sm:$0xff] %v29
    %32 = vst [vmem:[#allocation5 + $0x8] sm:$0xff] %v30
    // Predicated region
    $region10: #{tpu_custom_call.1} parent=1 // pred_check
      _
    $region11: #{tpu_custom_call.1} parent=1 // pred_check_branch
      %34 = sbr.rel (0) target = $region13
    $region12: #{tpu_custom_call.1} parent=1 // pred_region
      %36 = vsyncadd [#allocation4], 0
      %s38 = sshll.u32 [#allocation5], 4
      %s39 = int_to_ptr.vmem [resolvable:$true] %s38
      %s40 = sshll.u32 %s1, 4
      %s41 = int_to_ptr.hbm [resolvable:$true] %s40
      %43 = dma.vmem_to_hbm [thread:$0]  %s39, 256, %s41, [#allocation4]
    $region13: #{tpu_custom_call.1} parent=1 // pred_fallthru
      _
    // Predicated region
    $region14: #{tpu_custom_call.1} parent=1 // pred_check
      _
    $region15: #{tpu_custom_call.1} parent=1 // pred_check_branch
      %45 = sbr.rel (0) target = $region17
    $region16: #{tpu_custom_call.1} parent=1 // pred_region
      %47 = dma.done [#allocation4], 256
    $region17: #{tpu_custom_call.1} parent=1 // pred_fallthru
      _
    %48 = vsyncpa [#allocation3], 1
    %49 = vsyncpa [#allocation4], 1

</llo_original>
